<compile_context>
chip_gen: v7x
topology: tpu7x:2x2x1
jax: 0.10.0
libtpu: 0.0.40
codegen_flags: <defaults>
</compile_context>

<pallas_src>
import jax
import jax.numpy as jnp
from jax.experimental import pallas as pl
from jax.experimental.pallas import tpu as pltpu


def _round_up(x, m):
    return ((x + m - 1) // m) * m


def _largest_divisor_leq(n, cap):
    cap = max(1, min(cap, n))
    for d in range(cap, 0, -1):
        if n % d == 0:
            return d
    return 1


# Per-TPU-generation tiling / VMEM policy:
#   v5e: 16 MiB default scoped VMEM -> keep the block budget well under it.
#   v6e: 128 MiB VMEM, single TensorCore -> big mode blocks, no step-count clamp.
#   v7x: 64 MiB VMEM (32 MiB default scoped), 2 TensorCores -> modest budget,
#        >=4 grid steps (>=2 per core, double-buffer overlap) and an even step count.
_GEN_CONFIG = {
    "v5e":   dict(vmem_budget=12 << 20, max_tm=32,  min_steps=1, even_steps=False, vmem_cap=96 << 20),
    "v6e":   dict(vmem_budget=56 << 20, max_tm=128, min_steps=1, even_steps=False, vmem_cap=100 << 20),
    "v7x":   dict(vmem_budget=24 << 20, max_tm=32,  min_steps=4, even_steps=True,  vmem_cap=48 << 20),
    "other": dict(vmem_budget=12 << 20, max_tm=32,  min_steps=1, even_steps=False, vmem_cap=64 << 20),
}


def _tpu_generation():
    try:
        kind = jax.devices()[0].device_kind.lower()
    except Exception:
        return "other"
    if "v6" in kind:
        return "v6e"
    if "v5e" in kind or "v5 lite" in kind or "v5litepod" in kind:
        return "v5e"
    if "v7" in kind or "tpu7" in kind or "7x" in kind:
        return "v7x"
    return "other"


def _choose_mode_tile(m_pad, b_pad, k_pad, n_pad, cfg):
    """Modes per grid step + per-mode double-buffered VMEM footprint (bytes)."""
    # double-buffered bytes per mode: f32 x-block + bf16 w-block + bf16 out-block
    per_mode = 2 * (b_pad * k_pad * 4 + k_pad * n_pad * 2 + b_pad * n_pad * 2)
    tm = min(m_pad, cfg["max_tm"], max(1, cfg["vmem_budget"] // per_mode))
    if cfg["min_steps"] > 1:                       # v7x megacore: >=2 steps per TC
        tm = min(tm, max(1, m_pad // cfg["min_steps"]))
    tm = _largest_divisor_leq(m_pad, tm)           # grid must tile M_pad exactly
    if cfg["even_steps"]:                          # even step count: TC load balance
        while tm > 1 and (m_pad // tm) % 2 == 1:
            tm = _largest_divisor_leq(m_pad, tm - 1)
    return max(1, tm), per_mode


# ---------------------------------------------------------------------------
# Pallas kernel: per grid step, a batched (over TM modes) real matmul
#   (TM, B_pad, K_pad) x (TM, K_pad, N_pad) -> (TM, B_pad, N_pad)
# where K = stacked [re | im] input channels, N = stacked [re | im] output channels.
# ---------------------------------------------------------------------------
def _spectral_mul_kernel(x_ref, w_ref, o_ref):
    acc = jax.lax.dot_general(
        x_ref[...], w_ref[...].astype(jnp.float32),     # bf16 weights -> f32 in VMEM
        dimension_numbers=(((2,), (1,)), ((0,), (0,))), # contract K, batch over modes
        preferred_element_type=jnp.float32,             # f32 accumulation on the MXU
    )
    o_ref[...] = acc.astype(o_ref.dtype)                # bf16 store: halves output HBM bytes


# ---------------------------------------------------------------------------
# One-time weight relayout (hoisted out of the forward pass; TM-independent).
# ---------------------------------------------------------------------------
def pack_spectral_weights(w_re, w_im):
    """(Cin, Cout, M) real+imag -> (M_pad, K_pad, N_pad) bf16 packed weight.

    Per-mode layout  [[ wr,  wi],
                      [-wi,  wr]]  so that [xr|xi] @ W = [out_r | out_i].
    Modes padded to a fixed multiple of 8 (independent of the runtime tile choice),
    channels padded to 128-lane tiles.  Call ONCE per layer at init.
    """
    c_in, c_out, m = w_re.shape
    k_pad = _round_up(2 * c_in, 128)
    n_pad = _round_up(2 * c_out, 128)
    m_pad = _round_up(m, 8)

    wr = jnp.transpose(w_re, (2, 0, 1)).astype(jnp.float32)      # (M, Cin, Cout)
    wi = jnp.transpose(w_im, (2, 0, 1)).astype(jnp.float32)
    top = jnp.concatenate([wr, wi], axis=-1)                     # rows hit by xr
    bot = jnp.concatenate([-wi, wr], axis=-1)                    # rows hit by xi
    w_stacked = jnp.concatenate([top, bot], axis=1).astype(jnp.bfloat16)  # (M, 2Cin, 2Cout)
    return jax.lax.pad(
        w_stacked, jnp.zeros((), jnp.bfloat16),
        [(0, m_pad - m, 0), (0, k_pad - 2 * c_in, 0), (0, n_pad - 2 * c_out, 0)])


# ---------------------------------------------------------------------------
# Forward pass (packed-weight hot path).
# ---------------------------------------------------------------------------
def spectral_conv1d_packed(x, w_packed, modes1, out_channels, *, weight_buffer_count=None):
    """x: (B, Cin, N) f32; w_packed from pack_spectral_weights -> (B, Cout, N) f32."""
    b, c_in, n = x.shape
    m = modes1
    nfreq = n // 2 + 1
    if m > nfreq:
        raise ValueError(f"modes1={m} exceeds N//2+1={nfreq}")
    m_pad, k_pad, n_pad = w_packed.shape
    if k_pad < 2 * c_in or n_pad < 2 * out_channels or m_pad < m or m_pad % 8 != 0:
        raise ValueError("w_packed does not match (in_channels, out_channels, modes1)")
    b_pad = _round_up(b, 16)          # full bf16 vreg sublanes on the output store

    cfg = _GEN_CONFIG[_tpu_generation()]
    tm, per_mode = _choose_mode_tile(m_pad, b_pad, k_pad, n_pad, cfg)

    # TODO(synk): FFT has no Pallas primitive; rfft/irfft stay plain-JAX (XLA) glue.
    x_m = jnp.fft.rfft(x, axis=-1)[:, :, :m]                     # (B, Cin, M) complex64

    # Single relayout pass: mode-major, [re|im] stacked along the contraction axis, f32.
    x_ri = jnp.transpose(
        jnp.concatenate([jnp.real(x_m), jnp.imag(x_m)], axis=1), (2, 0, 1))  # (M, B, 2Cin)
    x_packed = jax.lax.pad(
        x_ri.astype(jnp.float32), jnp.zeros((), jnp.float32),
        [(0, m_pad - m, 0), (0, b_pad - b, 0), (0, k_pad - 2 * c_in, 0)])

    grid = (m_pad // tm,)
    x_spec = pl.BlockSpec((tm, b_pad, k_pad), lambda i: (i, 0, 0))
    w_kwargs = {}
    extra_wbuf_bytes = 0
    if weight_buffer_count is not None:
        # v7x knob: deeper buffering on the (largest) weight stream only, if profiling
        # shows exposed weight DMA at the chosen TM.  Accounted for in vmem_limit below.
        w_kwargs["pipeline_mode"] = pl.Buffered(weight_buffer_count)
        extra_wbuf_bytes = max(0, weight_buffer_count - 2) * tm * k_pad * n_pad * 2
    w_spec = pl.BlockSpec((tm, k_pad, n_pad), lambda i: (i, 0, 0), **w_kwargs)
    o_spec = pl.BlockSpec((tm, b_pad, n_pad), lambda i: (i, 0, 0))

    # Honor the tiling heuristic: scoped-VMEM limit = chosen footprint + 20% + slack,
    # capped per generation (v7x has only 64 MiB physical VMEM).
    vmem_limit = int(min(cfg["vmem_cap"],
                         max(16 << 20, 1.2 * (tm * per_mode + extra_wbuf_bytes) + (2 << 20))))

    cost = pl.CostEstimate(
        flops=2 * m_pad * b_pad * k_pad * n_pad,
        transcendentals=0,
        bytes_accessed=(m_pad * b_pad * k_pad * 4        # x (f32)
                        + m_pad * k_pad * n_pad * 2      # w (bf16)
                        + m_pad * b_pad * n_pad * 2),    # out (bf16)
    )

    out = pl.pallas_call(
        _spectral_mul_kernel,
        out_shape=jax.ShapeDtypeStruct((m_pad, b_pad, n_pad), jnp.bfloat16),
        grid=grid,
        in_specs=[x_spec, w_spec],
        out_specs=o_spec,
        compiler_params=pltpu.CompilerParams(
            dimension_semantics=("parallel",),
            vmem_limit_bytes=vmem_limit),
        cost_estimate=cost,
    )(x_packed, w_packed)

    # Fused unpack: slice [out_r | out_i], recombine to complex, mode-minor transpose,
    # zero-pad the truncated spectrum, irfft.
    out_r = out[:m, :b, :out_channels].astype(jnp.float32)
    out_i = out[:m, :b, out_channels:2 * out_channels].astype(jnp.float32)
    out_modes = jnp.transpose(jax.lax.complex(out_r, out_i), (1, 2, 0))   # (B, Cout, M)
    out_ft = jax.lax.pad(out_modes, jnp.zeros((), jnp.complex64),
                         [(0, 0, 0), (0, 0, 0), (0, nfreq - m, 0)])
    return jnp.fft.irfft(out_ft, n=n, axis=-1)                            # (B, Cout, N) f32


# ---------------------------------------------------------------------------
# Small-channel fallback + convenience wrapper.
# ---------------------------------------------------------------------------
def _spectral_conv1d_xla(x, w_re, w_im, modes1, out_channels):
    b, _, n = x.shape
    nfreq = n // 2 + 1
    x_ft = jnp.fft.rfft(x, axis=-1)
    w_c = (w_re + 1j * w_im).astype(jnp.complex64)
    out_modes = jnp.einsum('bix,iox->box', x_ft[:, :, :modes1], w_c)
    out_ft = jnp.zeros((b, out_channels, nfreq), dtype=jnp.complex64)
    out_ft = out_ft.at[:, :, :modes1].set(out_modes)
    return jnp.fft.irfft(out_ft, n=n, axis=-1)


def pallas_path_worthwhile(in_channels, out_channels, min_lane_fill=64):
    """The Pallas path pays off only when the stacked [re|im] channel dims come close
    to the 128-lane tile; below ~64 the padded lanes are mostly zeros -> plain XLA."""
    return 2 * in_channels >= min_lane_fill and 2 * out_channels >= min_lane_fill


def spectral_conv1d(x, w_re, w_im, modes1, *, w_packed=None, prefer_pallas=None):
    """Convenience wrapper matching the PyTorch module signature.

    NOTE: in a real FNO model call pack_spectral_weights() ONCE at init and use
    spectral_conv1d_packed() in the loop; w_packed=None here repacks every call.
    """
    in_channels, out_channels, _ = w_re.shape
    use_pallas = (pallas_path_worthwhile(in_channels, out_channels)
                  if prefer_pallas is None else prefer_pallas)
    if not use_pallas:
        return _spectral_conv1d_xla(x, w_re, w_im, modes1, out_channels)
    if w_packed is None:
        w_packed = pack_spectral_weights(w_re, w_im)
    return spectral_conv1d_packed(x, w_packed, modes1, out_channels)


def init_spectral_conv1d_params(key, in_channels, out_channels, modes1):
    """Matches torch: scale * torch.rand(in, out, modes, dtype=cfloat) (U[0,1) re & im)."""
    scale = 1.0 / (in_channels * out_channels)
    k_re, k_im = jax.random.split(key)
    w_re = scale * jax.random.uniform(k_re, (in_channels, out_channels, modes1), dtype=jnp.float32)
    w_im = scale * jax.random.uniform(k_im, (in_channels, out_channels, modes1), dtype=jnp.float32)
    return w_re, w_im


if __name__ == "__main__":
    # Kernel-friendly small shapes: 64 channels -> 2*C = 128 = exactly one lane tile.
    B, Cin, Cout, N, modes1 = 2, 64, 64, 16, 5

    key = jax.random.PRNGKey(0)
    k_x, k_w = jax.random.split(key)
    x = jax.random.normal(k_x, (B, Cin, N), dtype=jnp.float32)
    w_re, w_im = init_spectral_conv1d_params(k_w, Cin, Cout, modes1)

    w_packed = pack_spectral_weights(w_re, w_im)             # hoisted, once per layer
    fwd = jax.jit(spectral_conv1d_packed, static_argnums=(2, 3))
    out = jax.block_until_ready(fwd(x, w_packed, modes1, Cout))

    # Pure-JAX f32 reference of the same forward.
    x_ft = jnp.fft.rfft(x, axis=-1)
    w_c = (w_re + 1j * w_im).astype(jnp.complex64)
    ref_modes = jnp.einsum('bix,iox->box', x_ft[:, :, :modes1], w_c)
    ref_ft = jnp.zeros((B, Cout, N // 2 + 1), dtype=jnp.complex64)
    ref_ft = ref_ft.at[:, :, :modes1].set(ref_modes)
    ref = jnp.fft.irfft(ref_ft, n=N, axis=-1)

    assert out.shape == (B, Cout, N)
    # bf16 weights + bf16 output store (x spectrum and MXU accumulation stay f32).
    assert jnp.allclose(out, ref, atol=2e-2, rtol=2e-2), float(jnp.max(jnp.abs(out - ref)))

    # Small-channel config (the module's typical toy size) routes to the XLA fallback.
    xs = jax.random.normal(k_x, (2, 4, 16), dtype=jnp.float32)
    wr_s, wi_s = init_spectral_conv1d_params(k_w, 4, 4, 5)
    out_s = jax.block_until_ready(spectral_conv1d(xs, wr_s, wi_s, 5))
    assert out_s.shape == (2, 4, 16)

    print("KERNEL_OK")
</pallas_src>

<mosaic_0001>
module attributes {stable_mosaic.version = 11 : i64} {
  func.func @_spectral_mul_kernel(%arg0: i32, %arg1: memref<8x16x128xf32, #tpu.memory_space<vmem>>, %arg2: memref<8x128x128xbf16, #tpu.memory_space<vmem>>, %arg3: memref<8x16x128xbf16, #tpu.memory_space<vmem>>) attributes {dimension_semantics = [#tpu.dimension_semantics<parallel>], iteration_bounds = array<i64: 1>, scalar_prefetch = 0 : i64, scratch_operands = 0 : i64, tpu.core_type = #tpu.core_type<tc>, window_params = [{transform_indices = @transform_0, window_bounds = array<i64: 8, 16, 128>}, {transform_indices = @transform_1, window_bounds = array<i64: 8, 128, 128>}, {transform_indices = @transform_2, window_bounds = array<i64: 8, 16, 128>}]} {
    %c0 = arith.constant 0 : index
    %c0_0 = arith.constant 0 : index
    %c0_1 = arith.constant 0 : index
    %0 = vector.load %arg1[%c0, %c0_0, %c0_1] : memref<8x16x128xf32, #tpu.memory_space<vmem>>, vector<8x16x128xf32>
    %c0_2 = arith.constant 0 : index
    %c0_3 = arith.constant 0 : index
    %c0_4 = arith.constant 0 : index
    %1 = vector.load %arg2[%c0_2, %c0_3, %c0_4] : memref<8x128x128xbf16, #tpu.memory_space<vmem>>, vector<8x128x128xbf16>
    %2 = arith.extf %1 : vector<8x128x128xbf16> to vector<8x128x128xf32>
    %cst = arith.constant dense<0.000000e+00> : vector<8x16x128xf32>
    %3 = tpu.matmul %0, %2, %cst {dimension_numbers = #tpu.dot_dimension_numbers<[2], [1], [1], [2], [0, 0, 0, 1, 1, 2], [0], [0]>} : vector<8x16x128xf32>, vector<8x128x128xf32>, vector<8x16x128xf32> -> vector<8x16x128xf32>
    %4 = arith.truncf %3 : vector<8x16x128xf32> to vector<8x16x128xbf16>
    %c0_5 = arith.constant 0 : index
    %c0_6 = arith.constant 0 : index
    %c0_7 = arith.constant 0 : index
    %5 = vector.load %arg3[%c0_5, %c0_6, %c0_7] : memref<8x16x128xbf16, #tpu.memory_space<vmem>>, vector<8x16x128xbf16>
    tpu.vector_store %arg3[%c0_5, %c0_6, %c0_7], %4 {strides = array<i32>} : memref<8x16x128xbf16, #tpu.memory_space<vmem>>, vector<8x16x128xbf16>,
    return
  }
  func.func @transform_0(%arg0: i32) -> (i32, i32, i32) {
    %c0_i32 = arith.constant 0 : i32
    %c0_i32_0 = arith.constant 0 : i32
    %c0_i32_1 = arith.constant 0 : i32
    return %arg0, %c0_i32, %c0_i32_0 : i32, i32, i32
  }
  func.func @transform_1(%arg0: i32) -> (i32, i32, i32) {
    %c0_i32 = arith.constant 0 : i32
    %c0_i32_0 = arith.constant 0 : i32
    %c0_i32_1 = arith.constant 0 : i32
    return %arg0, %c0_i32, %c0_i32_0 : i32, i32, i32
  }
  func.func @transform_2(%arg0: i32) -> (i32, i32, i32) {
    %c0_i32 = arith.constant 0 : i32
    %c0_i32_0 = arith.constant 0 : i32
    %c0_i32_1 = arith.constant 0 : i32
    return %arg0, %c0_i32, %c0_i32_0 : i32, i32, i32
  }
}

</mosaic_0001>

<llo_original>
// kernel: reverse.1
$region0: #{reverse.1}
  #allocation0 [shape = 's32[1]{0}', space=sflag, size = 0x4, scoped, tag = 'scoped memory for reverse.1']
  %s0 = inlined_call_operand.vmem [shape: f32[2,64,7], index: 0, kind: input, shape index: {}]
  %s1 = inlined_call_operand.vmem [shape: f32[2,64,7], index: 1, kind: output, shape index: {}]
  %s2 = scalar_lea.vmem %s0, 12
  %v3 = vld [vmem:[%s2] sm:$0x3]
  %4 = vst [vmem:[%s1] sm:$0x3] %v3
  %s5 = scalar_lea.vmem %s0, 10
  %v6 = vld [vmem:[%s5] sm:$0x3]
  %s7 = scalar_lea.vmem %s1, 2
  %8 = vst [vmem:[%s7] sm:$0x3] %v6
  %s9 = scalar_lea.vmem %s0, 8
  %v10 = vld [vmem:[%s9] sm:$0x3]
  %s11 = scalar_lea.vmem %s1, 4
  %12 = vst [vmem:[%s11] sm:$0x3] %v10
  %s13 = scalar_lea.vmem %s0, 6
  %v14 = vld [vmem:[%s13] sm:$0x3]
  %s15 = scalar_lea.vmem %s1, 6
  %16 = vst [vmem:[%s15] sm:$0x3] %v14
  %s17 = scalar_lea.vmem %s0, 4
  %v18 = vld [vmem:[%s17] sm:$0x3]
  %s19 = scalar_lea.vmem %s1, 8
  %20 = vst [vmem:[%s19] sm:$0x3] %v18
  %s21 = scalar_lea.vmem %s0, 2
  %v22 = vld [vmem:[%s21] sm:$0x3]
  %s23 = scalar_lea.vmem %s1, 10
  %24 = vst [vmem:[%s23] sm:$0x3] %v22
  %v25 = vld [vmem:[%s0] sm:$0x3]
  %s26 = scalar_lea.vmem %s1, 12
  %27 = vst [vmem:[%s26] sm:$0x3] %v25

// kernel: spectral_conv1d_packed.1
$region0: #{spectral_conv1d_packed.1}
  #allocation0 [shape = 'u32[]', space=smem, size = 0x4, offset = 0x4, fixed_abs, tag = 'smem constant byte address 0x4 - core index']
  #allocation1 [shape = 'u32[144,128]{1,0:T(1,128)}', space=vmem, size = 0x12000, scoped, tag = 'internal scratch']
  %s0 = inlined_call_operand.vmem [shape: f32[8,16,128], index: 0, kind: input, shape index: {}]
  %s1 = inlined_call_operand.vmem [shape: bf16[8,128,128], index: 1, kind: input, shape index: {}]
  %s2 = inlined_call_operand.vmem [shape: bf16[8,16,128], index: 2, kind: output, shape index: {}]
  %s3 = sld [smem:[#allocation0]]
  $region18: #{spectral_conv1d_packed.1} parent=0
    _
  %s5 = ssub.s32 1, %s3
  %s6 = scalar_select 0, %s5, %s3
  // Predicated region
  $region2: #{spectral_conv1d_packed.1} parent=0 // pred_check
    _
  $region3: #{spectral_conv1d_packed.1} parent=0 // pred_check_branch
    %8 = sbr.rel (0) target = $region5
  $region4: #{spectral_conv1d_packed.1} parent=0 // pred_region
    _
  $region5: #{spectral_conv1d_packed.1} parent=0 // pred_fallthru
    _
  // Predicated region
  $region6: #{spectral_conv1d_packed.1} parent=0 // pred_check
    _
  $region7: #{spectral_conv1d_packed.1} parent=0 // pred_check_branch
    %10 = sbr.rel (0) target = $region9
  $region8: #{spectral_conv1d_packed.1} parent=0 // pred_region
    _
  $region9: #{spectral_conv1d_packed.1} parent=0 // pred_fallthru
    _
  %v11 = vld [vmem:[%s0] sm:$0xff]
  %v12 = vld [vmem:[%s0 + $0x8] sm:$0xff]
  %v13 = vld [vmem:[%s0 + $0x10] sm:$0xff]
  %v14 = vld [vmem:[%s0 + $0x18] sm:$0xff]
  %v15 = vld [vmem:[%s0 + $0x20] sm:$0xff]
  %v16 = vld [vmem:[%s0 + $0x28] sm:$0xff]
  %v17 = vld [vmem:[%s0 + $0x30] sm:$0xff]
  %v18 = vld [vmem:[%s0 + $0x38] sm:$0xff]
  %v19 = vld [vmem:[%s0 + $0x40] sm:$0xff]
  %v20 = vld [vmem:[%s0 + $0x48] sm:$0xff]
  %v21 = vld [vmem:[%s0 + $0x50] sm:$0xff]
  %v22 = vld [vmem:[%s0 + $0x58] sm:$0xff]
  %v23 = vld [vmem:[%s0 + $0x60] sm:$0xff]
  %v24 = vld [vmem:[%s0 + $0x68] sm:$0xff]
  %v25 = vld [vmem:[%s0 + $0x70] sm:$0xff]
  %v26 = vld [vmem:[%s0 + $0x78] sm:$0xff]
  %v27 = vld [vmem:[%s1] sm:$0xf]
  %v28 = vld [vmem:[%s1 + $0x4] sm:$0xf]
  %v29 = vld [vmem:[%s1 + $0x8] sm:$0xf]
  %v30 = vld [vmem:[%s1 + $0xc] sm:$0xf]
  %v31 = vld [vmem:[%s1 + $0x10] sm:$0xf]
  %v32 = vld [vmem:[%s1 + $0x14] sm:$0xf]
  %v33 = vld [vmem:[%s1 + $0x18] sm:$0xf]
  %v34 = vld [vmem:[%s1 + $0x1c] sm:$0xf]
  %v35 = vld [vmem:[%s1 + $0x20] sm:$0xf]
  %v36 = vld [vmem:[%s1 + $0x24] sm:$0xf]
  %v37 = vld [vmem:[%s1 + $0x28] sm:$0xf]
  %v38 = vld [vmem:[%s1 + $0x2c] sm:$0xf]
  %v39 = vld [vmem:[%s1 + $0x30] sm:$0xf]
  %v40 = vld [vmem:[%s1 + $0x34] sm:$0xf]
  %v41 = vld [vmem:[%s1 + $0x38] sm:$0xf]
  %v42 = vld [vmem:[%s1 + $0x3c] sm:$0xf]
  %v43 = vld [vmem:[%s1 + $0x40] sm:$0xf]
  %v44 = vld [vmem:[%s1 + $0x44] sm:$0xf]
  %v45 = vld [vmem:[%s1 + $0x48] sm:$0xf]
  %v46 = vld [vmem:[%s1 + $0x4c] sm:$0xf]
  %v47 = vld [vmem:[%s1 + $0x50] sm:$0xf]
  %v48 = vld [vmem:[%s1 + $0x54] sm:$0xf]
  %v49 = vld [vmem:[%s1 + $0x58] sm:$0xf]
  %v50 = vld [vmem:[%s1 + $0x5c] sm:$0xf]
  %v51 = vld [vmem:[%s1 + $0x60] sm:$0xf]
  %v52 = vld [vmem:[%s1 + $0x64] sm:$0xf]
  %v53 = vld [vmem:[%s1 + $0x68] sm:$0xf]
  %v54 = vld [vmem:[%s1 + $0x6c] sm:$0xf]
  %v55 = vld [vmem:[%s1 + $0x70] sm:$0xf]
  %v56 = vld [vmem:[%s1 + $0x74] sm:$0xf]
  %v57 = vld [vmem:[%s1 + $0x78] sm:$0xf]
  %v58 = vld [vmem:[%s1 + $0x7c] sm:$0xf]
  %v59 = vld [vmem:[%s1 + $0x80] sm:$0xf]
  %v60 = vld [vmem:[%s1 + $0x84] sm:$0xf]
  %v61 = vld [vmem:[%s1 + $0x88] sm:$0xf]
  %v62 = vld [vmem:[%s1 + $0x8c] sm:$0xf]
  %v63 = vld [vmem:[%s1 + $0x90] sm:$0xf]
  %v64 = vld [vmem:[%s1 + $0x94] sm:$0xf]
  %v65 = vld [vmem:[%s1 + $0x98] sm:$0xf]
  %v66 = vld [vmem:[%s1 + $0x9c] sm:$0xf]
  %v67 = vld [vmem:[%s1 + $0xa0] sm:$0xf]
  %v68 = vld [vmem:[%s1 + $0xa4] sm:$0xf]
  %v69 = vld [vmem:[%s1 + $0xa8] sm:$0xf]
  %v70 = vld [vmem:[%s1 + $0xac] sm:$0xf]
  %v71 = vld [vmem:[%s1 + $0xb0] sm:$0xf]
  %v72 = vld [vmem:[%s1 + $0xb4] sm:$0xf]
  %v73 = vld [vmem:[%s1 + $0xb8] sm:$0xf]
  %v74 = vld [vmem:[%s1 + $0xbc] sm:$0xf]
  %v75 = vld [vmem:[%s1 + $0xc0] sm:$0xf]
  %v76 = vld [vmem:[%s1 + $0xc4] sm:$0xf]
  %v77 = vld [vmem:[%s1 + $0xc8] sm:$0xf]
  %v78 = vld [vmem:[%s1 + $0xcc] sm:$0xf]
  %v79 = vld [vmem:[%s1 + $0xd0] sm:$0xf]
  %v80 = vld [vmem:[%s1 + $0xd4] sm:$0xf]
  %v81 = vld [vmem:[%s1 + $0xd8] sm:$0xf]
  %v82 = vld [vmem:[%s1 + $0xdc] sm:$0xf]
  %v83 = vld [vmem:[%s1 + $0xe0] sm:$0xf]
  %v84 = vld [vmem:[%s1 + $0xe4] sm:$0xf]
  %v85 = vld [vmem:[%s1 + $0xe8] sm:$0xf]
  %v86 = vld [vmem:[%s1 + $0xec] sm:$0xf]
  %v87 = vld [vmem:[%s1 + $0xf0] sm:$0xf]
  %v88 = vld [vmem:[%s1 + $0xf4] sm:$0xf]
  %v89 = vld [vmem:[%s1 + $0xf8] sm:$0xf]
  %v90 = vld [vmem:[%s1 + $0xfc] sm:$0xf]
  %v91 = vld [vmem:[%s1 + $0x100] sm:$0xf]
  %v92 = vld [vmem:[%s1 + $0x104] sm:$0xf]
  %v93 = vld [vmem:[%s1 + $0x108] sm:$0xf]
  %v94 = vld [vmem:[%s1 + $0x10c] sm:$0xf]
  %v95 = vld [vmem:[%s1 + $0x110] sm:$0xf]
  %v96 = vld [vmem:[%s1 + $0x114] sm:$0xf]
  %v97 = vld [vmem:[%s1 + $0x118] sm:$0xf]
  %v98 = vld [vmem:[%s1 + $0x11c] sm:$0xf]
  %v99 = vld [vmem:[%s1 + $0x120] sm:$0xf]
  %v100 = vld [vmem:[%s1 + $0x124] sm:$0xf]
  %v101 = vld [vmem:[%s1 + $0x128] sm:$0xf]
  %v102 = vld [vmem:[%s1 + $0x12c] sm:$0xf]
  %v103 = vld [vmem:[%s1 + $0x130] sm:$0xf]
  %v104 = vld [vmem:[%s1 + $0x134] sm:$0xf]
  %v105 = vld [vmem:[%s1 + $0x138] sm:$0xf]
  %v106 = vld [vmem:[%s1 + $0x13c] sm:$0xf]
  %v107 = vld [vmem:[%s1 + $0x140] sm:$0xf]
  %v108 = vld [vmem:[%s1 + $0x144] sm:$0xf]
  %v109 = vld [vmem:[%s1 + $0x148] sm:$0xf]
  %v110 = vld [vmem:[%s1 + $0x14c] sm:$0xf]
  %v111 = vld [vmem:[%s1 + $0x150] sm:$0xf]
  %v112 = vld [vmem:[%s1 + $0x154] sm:$0xf]
  %v113 = vld [vmem:[%s1 + $0x158] sm:$0xf]
  %v114 = vld [vmem:[%s1 + $0x15c] sm:$0xf]
  %v115 = vld [vmem:[%s1 + $0x160] sm:$0xf]
  %v116 = vld [vmem:[%s1 + $0x164] sm:$0xf]
  %v117 = vld [vmem:[%s1 + $0x168] sm:$0xf]
  %v118 = vld [vmem:[%s1 + $0x16c] sm:$0xf]
  %v119 = vld [vmem:[%s1 + $0x170] sm:$0xf]
  %v120 = vld [vmem:[%s1 + $0x174] sm:$0xf]
  %v121 = vld [vmem:[%s1 + $0x178] sm:$0xf]
  %v122 = vld [vmem:[%s1 + $0x17c] sm:$0xf]
  %v123 = vld [vmem:[%s1 + $0x180] sm:$0xf]
  %v124 = vld [vmem:[%s1 + $0x184] sm:$0xf]
  %v125 = vld [vmem:[%s1 + $0x188] sm:$0xf]
  %v126 = vld [vmem:[%s1 + $0x18c] sm:$0xf]
  %v127 = vld [vmem:[%s1 + $0x190] sm:$0xf]
  %v128 = vld [vmem:[%s1 + $0x194] sm:$0xf]
  %v129 = vld [vmem:[%s1 + $0x198] sm:$0xf]
  %v130 = vld [vmem:[%s1 + $0x19c] sm:$0xf]
  %v131 = vld [vmem:[%s1 + $0x1a0] sm:$0xf]
  %v132 = vld [vmem:[%s1 + $0x1a4] sm:$0xf]
  %v133 = vld [vmem:[%s1 + $0x1a8] sm:$0xf]
  %v134 = vld [vmem:[%s1 + $0x1ac] sm:$0xf]
  %v135 = vld [vmem:[%s1 + $0x1b0] sm:$0xf]
  %v136 = vld [vmem:[%s1 + $0x1b4] sm:$0xf]
  %v137 = vld [vmem:[%s1 + $0x1b8] sm:$0xf]
  %v138 = vld [vmem:[%s1 + $0x1bc] sm:$0xf]
  %v139 = vld [vmem:[%s1 + $0x1c0] sm:$0xf]
  %v140 = vld [vmem:[%s1 + $0x1c4] sm:$0xf]
  %v141 = vld [vmem:[%s1 + $0x1c8] sm:$0xf]
  %v142 = vld [vmem:[%s1 + $0x1cc] sm:$0xf]
  %v143 = vld [vmem:[%s1 + $0x1d0] sm:$0xf]
  %v144 = vld [vmem:[%s1 + $0x1d4] sm:$0xf]
  %v145 = vld [vmem:[%s1 + $0x1d8] sm:$0xf]
  %v146 = vld [vmem:[%s1 + $0x1dc] sm:$0xf]
  %v147 = vld [vmem:[%s1 + $0x1e0] sm:$0xf]
  %v148 = vld [vmem:[%s1 + $0x1e4] sm:$0xf]
  %v149 = vld [vmem:[%s1 + $0x1e8] sm:$0xf]
  %v150 = vld [vmem:[%s1 + $0x1ec] sm:$0xf]
  %v151 = vld [vmem:[%s1 + $0x1f0] sm:$0xf]
  %v152 = vld [vmem:[%s1 + $0x1f4] sm:$0xf]
  %v153 = vld [vmem:[%s1 + $0x1f8] sm:$0xf]
  %v154 = vld [vmem:[%s1 + $0x1fc] sm:$0xf]
  %v155 = vunpack.c.l.bf16 %v27
  %v156 = vunpack.c.l.bf16 %v28
  %v157 = vunpack.c.l.bf16 %v29
  %v158 = vunpack.c.l.bf16 %v30
  %v159 = vunpack.c.l.bf16 %v31
  %v160 = vunpack.c.l.bf16 %v32
  %v161 = vunpack.c.l.bf16 %v33
  %v162 = vunpack.c.l.bf16 %v34
  %v163 = vunpack.c.l.bf16 %v35
  %v164 = vunpack.c.l.bf16 %v36
  %v165 = vunpack.c.l.bf16 %v37
  %v166 = vunpack.c.l.bf16 %v38
  %v167 = vunpack.c.l.bf16 %v39
  %v168 = vunpack.c.l.bf16 %v40
  %v169 = vunpack.c.l.bf16 %v41
  %v170 = vunpack.c.l.bf16 %v42
  %v171 = vunpack.c.l.bf16 %v43
  %v172 = vunpack.c.l.bf16 %v44
  %v173 = vunpack.c.l.bf16 %v45
  %v174 = vunpack.c.l.bf16 %v46
  %v175 = vunpack.c.l.bf16 %v47
  %v176 = vunpack.c.l.bf16 %v48
  %v177 = vunpack.c.l.bf16 %v49
  %v178 = vunpack.c.l.bf16 %v50
  %v179 = vunpack.c.l.bf16 %v51
  %v180 = vunpack.c.l.bf16 %v52
  %v181 = vunpack.c.l.bf16 %v53
  %v182 = vunpack.c.l.bf16 %v54
  %v183 = vunpack.c.l.bf16 %v55
  %v184 = vunpack.c.l.bf16 %v56
  %v185 = vunpack.c.l.bf16 %v57
  %v186 = vunpack.c.l.bf16 %v58
  %v187 = vunpack.c.l.bf16 %v59
  %v188 = vunpack.c.l.bf16 %v60
  %v189 = vunpack.c.l.bf16 %v61
  %v190 = vunpack.c.l.bf16 %v62
  %v191 = vunpack.c.l.bf16 %v63
  %v192 = vunpack.c.l.bf16 %v64
  %v193 = vunpack.c.l.bf16 %v65
  %v194 = vunpack.c.l.bf16 %v66
  %v195 = vunpack.c.l.bf16 %v67
  %v196 = vunpack.c.l.bf16 %v68
  %v197 = vunpack.c.l.bf16 %v69
  %v198 = vunpack.c.l.bf16 %v70
  %v199 = vunpack.c.l.bf16 %v71
  %v200 = vunpack.c.l.bf16 %v72
  %v201 = vunpack.c.l.bf16 %v73
  %v202 = vunpack.c.l.bf16 %v74
  %v203 = vunpack.c.l.bf16 %v75
  %v204 = vunpack.c.l.bf16 %v76
  %v205 = vunpack.c.l.bf16 %v77
  %v206 = vunpack.c.l.bf16 %v78
  %v207 = vunpack.c.l.bf16 %v79
  %v208 = vunpack.c.l.bf16 %v80
  %v209 = vunpack.c.l.bf16 %v81
  %v210 = vunpack.c.l.bf16 %v82
  %v211 = vunpack.c.l.bf16 %v83
  %v212 = vunpack.c.l.bf16 %v84
  %v213 = vunpack.c.l.bf16 %v85
  %v214 = vunpack.c.l.bf16 %v86
  %v215 = vunpack.c.l.bf16 %v87
  %v216 = vunpack.c.l.bf16 %v88
  %v217 = vunpack.c.l.bf16 %v89
  %v218 = vunpack.c.l.bf16 %v90
  %v219 = vunpack.c.l.bf16 %v91
  %v220 = vunpack.c.l.bf16 %v92
  %v221 = vunpack.c.l.bf16 %v93
  %v222 = vunpack.c.l.bf16 %v94
  %v223 = vunpack.c.l.bf16 %v95
  %v224 = vunpack.c.l.bf16 %v96
  %v225 = vunpack.c.l.bf16 %v97
  %v226 = vunpack.c.l.bf16 %v98
  %v227 = vunpack.c.l.bf16 %v99
  %v228 = vunpack.c.l.bf16 %v100
  %v229 = vunpack.c.l.bf16 %v101
  %v230 = vunpack.c.l.bf16 %v102
  %v231 = vunpack.c.l.bf16 %v103
  %v232 = vunpack.c.l.bf16 %v104
  %v233 = vunpack.c.l.bf16 %v105
  %v234 = vunpack.c.l.bf16 %v106
  %v235 = vunpack.c.l.bf16 %v107
  %v236 = vunpack.c.l.bf16 %v108
  %v237 = vunpack.c.l.bf16 %v109
  %v238 = vunpack.c.l.bf16 %v110
  %v239 = vunpack.c.l.bf16 %v111
  %v240 = vunpack.c.l.bf16 %v112
  %v241 = vunpack.c.l.bf16 %v113
  %v242 = vunpack.c.l.bf16 %v114
  %v243 = vunpack.c.l.bf16 %v115
  %v244 = vunpack.c.l.bf16 %v116
  %v245 = vunpack.c.l.bf16 %v117
  %v246 = vunpack.c.l.bf16 %v118
  %v247 = vunpack.c.l.bf16 %v119
  %v248 = vunpack.c.l.bf16 %v120
  %v249 = vunpack.c.l.bf16 %v121
  %v250 = vunpack.c.l.bf16 %v122
  %v251 = vunpack.c.l.bf16 %v123
  %v252 = vunpack.c.l.bf16 %v124
  %v253 = vunpack.c.l.bf16 %v125
  %v254 = vunpack.c.l.bf16 %v126
  %v255 = vunpack.c.l.bf16 %v127
  %v256 = vunpack.c.l.bf16 %v128
  %v257 = vunpack.c.l.bf16 %v129
  %v258 = vunpack.c.l.bf16 %v130
  %v259 = vunpack.c.l.bf16 %v131
  %v260 = vunpack.c.l.bf16 %v132
  %v261 = vunpack.c.l.bf16 %v133
  %v262 = vunpack.c.l.bf16 %v134
  %v263 = vunpack.c.l.bf16 %v135
  %v264 = vunpack.c.l.bf16 %v136
  %v265 = vunpack.c.l.bf16 %v137
  %v266 = vunpack.c.l.bf16 %v138
  %v267 = vunpack.c.l.bf16 %v139
  %v268 = vunpack.c.l.bf16 %v140
  %v269 = vunpack.c.l.bf16 %v141
  %v270 = vunpack.c.l.bf16 %v142
  %v271 = vunpack.c.l.bf16 %v143
  %v272 = vunpack.c.l.bf16 %v144
  %v273 = vunpack.c.l.bf16 %v145
  %v274 = vunpack.c.l.bf16 %v146
  %v275 = vunpack.c.l.bf16 %v147
  %v276 = vunpack.c.l.bf16 %v148
  %v277 = vunpack.c.l.bf16 %v149
  %v278 = vunpack.c.l.bf16 %v150
  %v279 = vunpack.c.l.bf16 %v151
  %v280 = vunpack.c.l.bf16 %v152
  %v281 = vunpack.c.l.bf16 %v153
  %v282 = vunpack.c.l.bf16 %v154
  %283 = vmatprep.subr.mxu0 0.0
  %284 = vmatpush1.msra.mxu0 %v155
  %285 = vmatprep.subr.mxu0 0.0
  %286 = vmatpush1.msra.mxu0 %v156
  %287 = vmatprep.subr.mxu0 0.0
  %288 = vmatpush1.msra.mxu0 %v157
  %289 = vmatprep.subr.mxu0 0.0
  %290 = vmatpush1.msra.mxu0 %v158
  %291 = vmatprep.subr.mxu0 0.0
  %292 = vmatpush1.msra.mxu0 %v159
  %293 = vmatprep.subr.mxu0 0.0
  %294 = vmatpush1.msra.mxu0 %v160
  %295 = vmatprep.subr.mxu0 0.0
  %296 = vmatpush1.msra.mxu0 %v161
  %297 = vmatprep.subr.mxu0 0.0
  %298 = vmatpush1.msra.mxu0 %v162
  %299 = vmatprep.subr.mxu0 0.0
  %300 = vmatpush1.msra.mxu0 %v163
  %301 = vmatprep.subr.mxu0 0.0
  %302 = vmatpush1.msra.mxu0 %v164
  %303 = vmatprep.subr.mxu0 0.0
  %304 = vmatpush1.msra.mxu0 %v165
  %305 = vmatprep.subr.mxu0 0.0
  %306 = vmatpush1.msra.mxu0 %v166
  %307 = vmatprep.subr.mxu0 0.0
  %308 = vmatpush1.msra.mxu0 %v167
  %309 = vmatprep.subr.mxu0 0.0
  %310 = vmatpush1.msra.mxu0 %v168
  %311 = vmatprep.subr.mxu0 0.0
  %312 = vmatpush1.msra.mxu0 %v169
  %313 = vmatprep.subr.mxu0 0.0
  %314 = vmatpush1.msra.mxu0 %v170
  %315 = vmatprep.subr.mxu0 0.0
  %316 = vmatpush1.msra.mxu0 0.0
  %317 = vmatprep.subr.mxu0 0.0
  %318 = vmatpush1.msra.mxu0 0.0
  %319 = vmatprep.subr.mxu0 0.0
  %320 = vmatpush1.msra.mxu0 0.0
  %321 = vmatprep.subr.mxu0 0.0
  %322 = vmatpush1.msra.mxu0 0.0
  %323 = vmatprep.subr.mxu0 0.0
  %324 = vmatpush1.msra.mxu0 0.0
  %325 = vmatprep.subr.mxu0 0.0
  %326 = vmatpush1.msra.mxu0 0.0
  %327 = vmatprep.subr.mxu0 0.0
  %328 = vmatpush1.msra.mxu0 0.0
  %329 = vmatprep.subr.mxu0 0.0
  %330 = vmatpush1.msra.mxu0 0.0
  %331 = vmatprep.subr.mxu0 0.0
  %332 = vmatpush1.msra.mxu0 0.0
  %333 = vmatprep.subr.mxu0 0.0
  %334 = vmatpush1.msra.mxu0 0.0
  %335 = vmatprep.subr.mxu0 0.0
  %336 = vmatpush1.msra.mxu0 0.0
  %337 = vmatprep.subr.mxu0 0.0
  %338 = vmatpush1.msra.mxu0 0.0
  %339 = vmatprep.subr.mxu0 0.0
  %340 = vmatpush1.msra.mxu0 0.0
  %341 = vmatprep.subr.mxu0 0.0
  %342 = vmatpush1.msra.mxu0 0.0
  %343 = vmatprep.subr.mxu0 0.0
  %344 = vmatpush1.msra.mxu0 0.0
  %345 = vmatprep.subr.mxu0 0.0
  %346 = vmatpush1.msra.mxu0 0.0
  %347 = vmatprep.mubr.f32.mxu0 0.0
  %348 = vmatmul.mubr.f32.gmra.mrb[0].mxu0 %v11
  %v349 = vpop.f32.mrb[0].mxu0
  %v350 = vadd.f32 0.0, %v349
  %v351 = vpop.f32.mrb[0].mxu0
  %352 = vmatprep.mubr.f32.mxu0 0.0
  %353 = vmatmul.mubr.f32.gmra.mrb[0].mxu0 %v12
  %v354 = vpop.f32.mrb[0].mxu0
  %v355 = vadd.f32 0.0, %v354
  %v356 = vpop.f32.mrb[0].mxu0
  %357 = vdwg.mxu0
  %358 = vmatprep.subr.mxu0 0.0
  %359 = vmatpush1.msra.mxu0 %v171
  %360 = vmatprep.subr.mxu0 0.0
  %361 = vmatpush1.msra.mxu0 %v172
  %362 = vmatprep.subr.mxu0 0.0
  %363 = vmatpush1.msra.mxu0 %v173
  %364 = vmatprep.subr.mxu0 0.0
  %365 = vmatpush1.msra.mxu0 %v174
  %366 = vmatprep.subr.mxu0 0.0
  %367 = vmatpush1.msra.mxu0 %v175
  %368 = vmatprep.subr.mxu0 0.0
  %369 = vmatpush1.msra.mxu0 %v176
  %370 = vmatprep.subr.mxu0 0.0
  %371 = vmatpush1.msra.mxu0 %v177
  %372 = vmatprep.subr.mxu0 0.0
  %373 = vmatpush1.msra.mxu0 %v178
  %374 = vmatprep.subr.mxu0 0.0
  %375 = vmatpush1.msra.mxu0 %v179
  %376 = vmatprep.subr.mxu0 0.0
  %377 = vmatpush1.msra.mxu0 %v180
  %378 = vmatprep.subr.mxu0 0.0
  %379 = vmatpush1.msra.mxu0 %v181
  %380 = vmatprep.subr.mxu0 0.0
  %381 = vmatpush1.msra.mxu0 %v182
  %382 = vmatprep.subr.mxu0 0.0
  %383 = vmatpush1.msra.mxu0 %v183
  %384 = vmatprep.subr.mxu0 0.0
  %385 = vmatpush1.msra.mxu0 %v184
  %386 = vmatprep.subr.mxu0 0.0
  %387 = vmatpush1.msra.mxu0 %v185
  %388 = vmatprep.subr.mxu0 0.0
  %389 = vmatpush1.msra.mxu0 %v186
  %390 = vmatprep.subr.mxu0 0.0
  %391 = vmatpush1.msra.mxu0 0.0
  %392 = vmatprep.subr.mxu0 0.0
  %393 = vmatpush1.msra.mxu0 0.0
  %394 = vmatprep.subr.mxu0 0.0
  %395 = vmatpush1.msra.mxu0 0.0
  %396 = vmatprep.subr.mxu0 0.0
  %397 = vmatpush1.msra.mxu0 0.0
  %398 = vmatprep.subr.mxu0 0.0
  %399 = vmatpush1.msra.mxu0 0.0
  %400 = vmatprep.subr.mxu0 0.0
  %401 = vmatpush1.msra.mxu0 0.0
  %402 = vmatprep.subr.mxu0 0.0
  %403 = vmatpush1.msra.mxu0 0.0
  %404 = vmatprep.subr.mxu0 0.0
  %405 = vmatpush1.msra.mxu0 0.0
  %406 = vmatprep.subr.mxu0 0.0
  %407 = vmatpush1.msra.mxu0 0.0
  %408 = vmatprep.subr.mxu0 0.0
  %409 = vmatpush1.msra.mxu0 0.0
  %410 = vmatprep.subr.mxu0 0.0
  %411 = vmatpush1.msra.mxu0 0.0
  %412 = vmatprep.subr.mxu0 0.0
  %413 = vmatpush1.msra.mxu0 0.0
  %414 = vmatprep.subr.mxu0 0.0
  %415 = vmatpush1.msra.mxu0 0.0
  %416 = vmatprep.subr.mxu0 0.0
  %417 = vmatpush1.msra.mxu0 0.0
  %418 = vmatprep.subr.mxu0 0.0
  %419 = vmatpush1.msra.mxu0 0.0
  %420 = vmatprep.subr.mxu0 0.0
  %421 = vmatpush1.msra.mxu0 0.0
  %422 = vmatprep.mubr.f32.mxu0 0.0
  %423 = vmatmul.mubr.f32.gmra.mrb[0].mxu0 %v13
  %v424 = vpop.f32.mrb[0].mxu0
  %v425 = vadd.f32 0.0, %v424
  %v426 = vpop.f32.mrb[0].mxu0
  %427 = vmatprep.mubr.f32.mxu0 0.0
  %428 = vmatmul.mubr.f32.gmra.mrb[0].mxu0 %v14
  %v429 = vpop.f32.mrb[0].mxu0
  %v430 = vadd.f32 0.0, %v429
  %v431 = vpop.f32.mrb[0].mxu0
  %432 = vdwg.mxu0
  %433 = vmatprep.subr.mxu0 0.0
  %434 = vmatpush1.msra.mxu0 %v187
  %435 = vmatprep.subr.mxu0 0.0
  %436 = vmatpush1.msra.mxu0 %v188
  %437 = vmatprep.subr.mxu0 0.0
  %438 = vmatpush1.msra.mxu0 %v189
  %439 = vmatprep.subr.mxu0 0.0
  %440 = vmatpush1.msra.mxu0 %v190
  %441 = vmatprep.subr.mxu0 0.0
  %442 = vmatpush1.msra.mxu0 %v191
  %443 = vmatprep.subr.mxu0 0.0
  %444 = vmatpush1.msra.mxu0 %v192
  %445 = vmatprep.subr.mxu0 0.0
  %446 = vmatpush1.msra.mxu0 %v193
  %447 = vmatprep.subr.mxu0 0.0
  %448 = vmatpush1.msra.mxu0 %v194
  %449 = vmatprep.subr.mxu0 0.0
  %450 = vmatpush1.msra.mxu0 %v195
  %451 = vmatprep.subr.mxu0 0.0
  %452 = vmatpush1.msra.mxu0 %v196
  %453 = vmatprep.subr.mxu0 0.0
  %454 = vmatpush1.msra.mxu0 %v197
  %455 = vmatprep.subr.mxu0 0.0
  %456 = vmatpush1.msra.mxu0 %v198
  %457 = vmatprep.subr.mxu0 0.0
  %458 = vmatpush1.msra.mxu0 %v199
  %459 = vmatprep.subr.mxu0 0.0
  %460 = vmatpush1.msra.mxu0 %v200
  %461 = vmatprep.subr.mxu0 0.0
  %462 = vmatpush1.msra.mxu0 %v201
  %463 = vmatprep.subr.mxu0 0.0
  %464 = vmatpush1.msra.mxu0 %v202
  %465 = vmatprep.subr.mxu0 0.0
  %466 = vmatpush1.msra.mxu0 0.0
  %467 = vmatprep.subr.mxu0 0.0
  %468 = vmatpush1.msra.mxu0 0.0
  %469 = vmatprep.subr.mxu0 0.0
  %470 = vmatpush1.msra.mxu0 0.0
  %471 = vmatprep.subr.mxu0 0.0
  %472 = vmatpush1.msra.mxu0 0.0
  %473 = vmatprep.subr.mxu0 0.0
  %474 = vmatpush1.msra.mxu0 0.0
  %475 = vmatprep.subr.mxu0 0.0
  %476 = vmatpush1.msra.mxu0 0.0
  %477 = vmatprep.subr.mxu0 0.0
  %478 = vmatpush1.msra.mxu0 0.0
  %479 = vmatprep.subr.mxu0 0.0
  %480 = vmatpush1.msra.mxu0 0.0
  %481 = vmatprep.subr.mxu0 0.0
  %482 = vmatpush1.msra.mxu0 0.0
  %483 = vmatprep.subr.mxu0 0.0
  %484 = vmatpush1.msra.mxu0 0.0
  %485 = vmatprep.subr.mxu0 0.0
  %486 = vmatpush1.msra.mxu0 0.0
  %487 = vmatprep.subr.mxu0 0.0
  %488 = vmatpush1.msra.mxu0 0.0
  %489 = vmatprep.subr.mxu0 0.0
  %490 = vmatpush1.msra.mxu0 0.0
  %491 = vmatprep.subr.mxu0 0.0
  %492 = vmatpush1.msra.mxu0 0.0
  %493 = vmatprep.subr.mxu0 0.0
  %494 = vmatpush1.msra.mxu0 0.0
  %495 = vmatprep.subr.mxu0 0.0
  %496 = vmatpush1.msra.mxu0 0.0
  %497 = vmatprep.mubr.f32.mxu0 0.0
  %498 = vmatmul.mubr.f32.gmra.mrb[0].mxu0 %v15
  %v499 = vpop.f32.mrb[0].mxu0
  %v500 = vadd.f32 0.0, %v499
  %v501 = vpop.f32.mrb[0].mxu0
  %502 = vmatprep.mubr.f32.mxu0 0.0
  %503 = vmatmul.mubr.f32.gmra.mrb[0].mxu0 %v16
  %v504 = vpop.f32.mrb[0].mxu0
  %v505 = vadd.f32 0.0, %v504
  %v506 = vpop.f32.mrb[0].mxu0
  %507 = vdwg.mxu0
  %508 = vmatprep.subr.mxu0 0.0
  %509 = vmatpush1.msra.mxu0 %v203
  %510 = vmatprep.subr.mxu0 0.0
  %511 = vmatpush1.msra.mxu0 %v204
  %512 = vmatprep.subr.mxu0 0.0
  %513 = vmatpush1.msra.mxu0 %v205
  %514 = vmatprep.subr.mxu0 0.0
  %515 = vmatpush1.msra.mxu0 %v206
  %516 = vmatprep.subr.mxu0 0.0
  %517 = vmatpush1.msra.mxu0 %v207
  %518 = vmatprep.subr.mxu0 0.0
  %519 = vmatpush1.msra.mxu0 %v208
  %520 = vmatprep.subr.mxu0 0.0
  %521 = vmatpush1.msra.mxu0 %v209
  %522 = vmatprep.subr.mxu0 0.0
  %523 = vmatpush1.msra.mxu0 %v210
  %524 = vmatprep.subr.mxu0 0.0
  %525 = vmatpush1.msra.mxu0 %v211
  %526 = vmatprep.subr.mxu0 0.0
  %527 = vmatpush1.msra.mxu0 %v212
  %528 = vmatprep.subr.mxu0 0.0
  %529 = vmatpush1.msra.mxu0 %v213
  %530 = vmatprep.subr.mxu0 0.0
  %531 = vmatpush1.msra.mxu0 %v214
  %532 = vmatprep.subr.mxu0 0.0
  %533 = vmatpush1.msra.mxu0 %v215
  %534 = vmatprep.subr.mxu0 0.0
  %535 = vmatpush1.msra.mxu0 %v216
  %536 = vmatprep.subr.mxu0 0.0
  %537 = vmatpush1.msra.mxu0 %v217
  %538 = vmatprep.subr.mxu0 0.0
  %539 = vmatpush1.msra.mxu0 %v218
  %540 = vmatprep.subr.mxu0 0.0
  %541 = vmatpush1.msra.mxu0 0.0
  %542 = vmatprep.subr.mxu0 0.0
  %543 = vmatpush1.msra.mxu0 0.0
  %544 = vmatprep.subr.mxu0 0.0
  %545 = vmatpush1.msra.mxu0 0.0
  %546 = vmatprep.subr.mxu0 0.0
  %547 = vmatpush1.msra.mxu0 0.0
  %548 = vmatprep.subr.mxu0 0.0
  %549 = vmatpush1.msra.mxu0 0.0
  %550 = vmatprep.subr.mxu0 0.0
  %551 = vmatpush1.msra.mxu0 0.0
  %552 = vmatprep.subr.mxu0 0.0
  %553 = vmatpush1.msra.mxu0 0.0
  %554 = vmatprep.subr.mxu0 0.0
  %555 = vmatpush1.msra.mxu0 0.0
  %556 = vmatprep.subr.mxu0 0.0
  %557 = vmatpush1.msra.mxu0 0.0
  %558 = vmatprep.subr.mxu0 0.0
  %559 = vmatpush1.msra.mxu0 0.0
  %560 = vmatprep.subr.mxu0 0.0
  %561 = vmatpush1.msra.mxu0 0.0
  %562 = vmatprep.subr.mxu0 0.0
  %563 = vmatpush1.msra.mxu0 0.0
  %564 = vmatprep.subr.mxu0 0.0
  %565 = vmatpush1.msra.mxu0 0.0
  %566 = vmatprep.subr.mxu0 0.0
  %567 = vmatpush1.msra.mxu0 0.0
  %568 = vmatprep.subr.mxu0 0.0
  %569 = vmatpush1.msra.mxu0 0.0
  %570 = vmatprep.subr.mxu0 0.0
  %571 = vmatpush1.msra.mxu0 0.0
  %572 = vmatprep.mubr.f32.mxu0 0.0
  %573 = vmatmul.mubr.f32.gmra.mrb[0].mxu0 %v17
  %v574 = vpop.f32.mrb[0].mxu0
  %v575 = vadd.f32 0.0, %v574
  %v576 = vpop.f32.mrb[0].mxu0
  %577 = vmatprep.mubr.f32.mxu0 0.0
  %578 = vmatmul.mubr.f32.gmra.mrb[0].mxu0 %v18
  %v579 = vpop.f32.mrb[0].mxu0
  %v580 = vadd.f32 0.0, %v579
  %v581 = vpop.f32.mrb[0].mxu0
  %582 = vdwg.mxu0
  %583 = vmatprep.subr.mxu0 0.0
  %584 = vmatpush1.msra.mxu0 %v219
  %585 = vmatprep.subr.mxu0 0.0
  %586 = vmatpush1.msra.mxu0 %v220
  %587 = vmatprep.subr.mxu0 0.0
  %588 = vmatpush1.msra.mxu0 %v221
  %589 = vmatprep.subr.mxu0 0.0
  %590 = vmatpush1.msra.mxu0 %v222
  %591 = vmatprep.subr.mxu0 0.0
  %592 = vmatpush1.msra.mxu0 %v223
  %593 = vmatprep.subr.mxu0 0.0
  %594 = vmatpush1.msra.mxu0 %v224
  %595 = vmatprep.subr.mxu0 0.0
  %596 = vmatpush1.msra.mxu0 %v225
  %597 = vmatprep.subr.mxu0 0.0
  %598 = vmatpush1.msra.mxu0 %v226
  %599 = vmatprep.subr.mxu0 0.0
  %600 = vmatpush1.msra.mxu0 %v227
  %601 = vmatprep.subr.mxu0 0.0
  %602 = vmatpush1.msra.mxu0 %v228
  %603 = vmatprep.subr.mxu0 0.0
  %604 = vmatpush1.msra.mxu0 %v229
  %605 = vmatprep.subr.mxu0 0.0
  %606 = vmatpush1.msra.mxu0 %v230
  %607 = vmatprep.subr.mxu0 0.0
  %608 = vmatpush1.msra.mxu0 %v231
  %609 = vmatprep.subr.mxu0 0.0
  %610 = vmatpush1.msra.mxu0 %v232
  %611 = vmatprep.subr.mxu0 0.0
  %612 = vmatpush1.msra.mxu0 %v233
  %613 = vmatprep.subr.mxu0 0.0
  %614 = vmatpush1.msra.mxu0 %v234
  %615 = vmatprep.subr.mxu0 0.0
  %616 = vmatpush1.msra.mxu0 0.0
  %617 = vmatprep.subr.mxu0 0.0
  %618 = vmatpush1.msra.mxu0 0.0
  %619 = vmatprep.subr.mxu0 0.0
  %620 = vmatpush1.msra.mxu0 0.0
  %621 = vmatprep.subr.mxu0 0.0
  %622 = vmatpush1.msra.mxu0 0.0
  %623 = vmatprep.subr.mxu0 0.0
  %624 = vmatpush1.msra.mxu0 0.0
  %625 = vmatprep.subr.mxu0 0.0
  %626 = vmatpush1.msra.mxu0 0.0
  %627 = vmatprep.subr.mxu0 0.0
  %628 = vmatpush1.msra.mxu0 0.0
  %629 = vmatprep.subr.mxu0 0.0
  %630 = vmatpush1.msra.mxu0 0.0
  %631 = vmatprep.subr.mxu0 0.0
  %632 = vmatpush1.msra.mxu0 0.0
  %633 = vmatprep.subr.mxu0 0.0
  %634 = vmatpush1.msra.mxu0 0.0
  %635 = vmatprep.subr.mxu0 0.0
  %636 = vmatpush1.msra.mxu0 0.0
  %637 = vmatprep.subr.mxu0 0.0
  %638 = vmatpush1.msra.mxu0 0.0
  %639 = vmatprep.subr.mxu0 0.0
  %640 = vmatpush1.msra.mxu0 0.0
  %641 = vmatprep.subr.mxu0 0.0
  %642 = vmatpush1.msra.mxu0 0.0
  %643 = vmatprep.subr.mxu0 0.0
  %644 = vmatpush1.msra.mxu0 0.0
  %645 = vmatprep.subr.mxu0 0.0
  %646 = vmatpush1.msra.mxu0 0.0
  %647 = vmatprep.mubr.f32.mxu0 0.0
  %648 = vmatmul.mubr.f32.gmra.mrb[0].mxu0 %v19
  %v649 = vpop.f32.mrb[0].mxu0
  %v650 = vadd.f32 0.0, %v649
  %v651 = vpop.f32.mrb[0].mxu0
  %652 = vmatprep.mubr.f32.mxu0 0.0
  %653 = vmatmul.mubr.f32.gmra.mrb[0].mxu0 %v20
  %v654 = vpop.f32.mrb[0].mxu0
  %v655 = vadd.f32 0.0, %v654
  %v656 = vpop.f32.mrb[0].mxu0
  %657 = vdwg.mxu0
  %658 = vmatprep.subr.mxu0 0.0
  %659 = vmatpush1.msra.mxu0 %v235
  %660 = vmatprep.subr.mxu0 0.0
  %661 = vmatpush1.msra.mxu0 %v236
  %662 = vmatprep.subr.mxu0 0.0
  %663 = vmatpush1.msra.mxu0 %v237
  %664 = vmatprep.subr.mxu0 0.0
  %665 = vmatpush1.msra.mxu0 %v238
  %666 = vmatprep.subr.mxu0 0.0
  %667 = vmatpush1.msra.mxu0 %v239
  %668 = vmatprep.subr.mxu0 0.0
  %669 = vmatpush1.msra.mxu0 %v240
  %670 = vmatprep.subr.mxu0 0.0
  %671 = vmatpush1.msra.mxu0 %v241
  %672 = vmatprep.subr.mxu0 0.0
  %673 = vmatpush1.msra.mxu0 %v242
  %674 = vmatprep.subr.mxu0 0.0
  %675 = vmatpush1.msra.mxu0 %v243
  %676 = vmatprep.subr.mxu0 0.0
  %677 = vmatpush1.msra.mxu0 %v244
  %678 = vmatprep.subr.mxu0 0.0
  %679 = vmatpush1.msra.mxu0 %v245
  %680 = vmatprep.subr.mxu0 0.0
  %681 = vmatpush1.msra.mxu0 %v246
  %682 = vmatprep.subr.mxu0 0.0
  %683 = vmatpush1.msra.mxu0 %v247
  %684 = vmatprep.subr.mxu0 0.0
  %685 = vmatpush1.msra.mxu0 %v248
  %686 = vmatprep.subr.mxu0 0.0
  %687 = vmatpush1.msra.mxu0 %v249
  %688 = vmatprep.subr.mxu0 0.0
  %689 = vmatpush1.msra.mxu0 %v250
  %690 = vmatprep.subr.mxu0 0.0
  %691 = vmatpush1.msra.mxu0 0.0
  %692 = vmatprep.subr.mxu0 0.0
  %693 = vmatpush1.msra.mxu0 0.0
  %694 = vmatprep.subr.mxu0 0.0
  %695 = vmatpush1.msra.mxu0 0.0
  %696 = vmatprep.subr.mxu0 0.0
  %697 = vmatpush1.msra.mxu0 0.0
  %698 = vmatprep.subr.mxu0 0.0
  %699 = vmatpush1.msra.mxu0 0.0
  %700 = vmatprep.subr.mxu0 0.0
  %701 = vmatpush1.msra.mxu0 0.0
  %702 = vmatprep.subr.mxu0 0.0
  %703 = vmatpush1.msra.mxu0 0.0
  %704 = vmatprep.subr.mxu0 0.0
  %705 = vmatpush1.msra.mxu0 0.0
  %706 = vmatprep.subr.mxu0 0.0
  %707 = vmatpush1.msra.mxu0 0.0
  %708 = vmatprep.subr.mxu0 0.0
  %709 = vmatpush1.msra.mxu0 0.0
  %710 = vmatprep.subr.mxu0 0.0
  %711 = vmatpush1.msra.mxu0 0.0
  %712 = vmatprep.subr.mxu0 0.0
  %713 = vmatpush1.msra.mxu0 0.0
  %714 = vmatprep.subr.mxu0 0.0
  %715 = vmatpush1.msra.mxu0 0.0
  %716 = vmatprep.subr.mxu0 0.0
  %717 = vmatpush1.msra.mxu0 0.0
  %718 = vmatprep.subr.mxu0 0.0
  %719 = vmatpush1.msra.mxu0 0.0
  %720 = vmatprep.subr.mxu0 0.0
  %721 = vmatpush1.msra.mxu0 0.0
  %722 = vmatprep.mubr.f32.mxu0 0.0
  %723 = vmatmul.mubr.f32.gmra.mrb[0].mxu0 %v21
  %v724 = vpop.f32.mrb[0].mxu0
  %v725 = vadd.f32 0.0, %v724
  %v726 = vpop.f32.mrb[0].mxu0
  %727 = vmatprep.mubr.f32.mxu0 0.0
  %728 = vmatmul.mubr.f32.gmra.mrb[0].mxu0 %v22
  %v729 = vpop.f32.mrb[0].mxu0
  %v730 = vadd.f32 0.0, %v729
  %v731 = vpop.f32.mrb[0].mxu0
  %732 = vdwg.mxu0
  %733 = vmatprep.subr.mxu0 0.0
  %734 = vmatpush1.msra.mxu0 %v251
  %735 = vmatprep.subr.mxu0 0.0
  %736 = vmatpush1.msra.mxu0 %v252
  %737 = vmatprep.subr.mxu0 0.0
  %738 = vmatpush1.msra.mxu0 %v253
  %739 = vmatprep.subr.mxu0 0.0
  %740 = vmatpush1.msra.mxu0 %v254
  %741 = vmatprep.subr.mxu0 0.0
  %742 = vmatpush1.msra.mxu0 %v255
  %743 = vmatprep.subr.mxu0 0.0
  %744 = vmatpush1.msra.mxu0 %v256
  %745 = vmatprep.subr.mxu0 0.0
  %746 = vmatpush1.msra.mxu0 %v257
  %747 = vmatprep.subr.mxu0 0.0
  %748 = vmatpush1.msra.mxu0 %v258
  %749 = vmatprep.subr.mxu0 0.0
  %750 = vmatpush1.msra.mxu0 %v259
  %751 = vmatprep.subr.mxu0 0.0
  %752 = vmatpush1.msra.mxu0 %v260
  %753 = vmatprep.subr.mxu0 0.0
  %754 = vmatpush1.msra.mxu0 %v261
  %755 = vmatprep.subr.mxu0 0.0
  %756 = vmatpush1.msra.mxu0 %v262
  %757 = vmatprep.subr.mxu0 0.0
  %758 = vmatpush1.msra.mxu0 %v263
  %759 = vmatprep.subr.mxu0 0.0
  %760 = vmatpush1.msra.mxu0 %v264
  %761 = vmatprep.subr.mxu0 0.0
  %762 = vmatpush1.msra.mxu0 %v265
  %763 = vmatprep.subr.mxu0 0.0
  %764 = vmatpush1.msra.mxu0 %v266
  %765 = vmatprep.subr.mxu0 0.0
  %766 = vmatpush1.msra.mxu0 0.0
  %767 = vmatprep.subr.mxu0 0.0
  %768 = vmatpush1.msra.mxu0 0.0
  %769 = vmatprep.subr.mxu0 0.0
  %770 = vmatpush1.msra.mxu0 0.0
  %771 = vmatprep.subr.mxu0 0.0
  %772 = vmatpush1.msra.mxu0 0.0
  %773 = vmatprep.subr.mxu0 0.0
  %774 = vmatpush1.msra.mxu0 0.0
  %775 = vmatprep.subr.mxu0 0.0
  %776 = vmatpush1.msra.mxu0 0.0
  %777 = vmatprep.subr.mxu0 0.0
  %778 = vmatpush1.msra.mxu0 0.0
  %779 = vmatprep.subr.mxu0 0.0
  %780 = vmatpush1.msra.mxu0 0.0
  %781 = vmatprep.subr.mxu0 0.0
  %782 = vmatpush1.msra.mxu0 0.0
  %783 = vmatprep.subr.mxu0 0.0
  %784 = vmatpush1.msra.mxu0 0.0
  %785 = vmatprep.subr.mxu0 0.0
  %786 = vmatpush1.msra.mxu0 0.0
  %787 = vmatprep.subr.mxu0 0.0
  %788 = vmatpush1.msra.mxu0 0.0
  %789 = vmatprep.subr.mxu0 0.0
  %790 = vmatpush1.msra.mxu0 0.0
  %791 = vmatprep.subr.mxu0 0.0
  %792 = vmatpush1.msra.mxu0 0.0
  %793 = vmatprep.subr.mxu0 0.0
  %794 = vmatpush1.msra.mxu0 0.0
  %795 = vmatprep.subr.mxu0 0.0
  %796 = vmatpush1.msra.mxu0 0.0
  %797 = vmatprep.mubr.f32.mxu0 0.0
  %798 = vmatmul.mubr.f32.gmra.mrb[0].mxu0 %v23
  %v799 = vpop.f32.mrb[0].mxu0
  %v800 = vadd.f32 0.0, %v799
  %v801 = vpop.f32.mrb[0].mxu0
  %802 = vmatprep.mubr.f32.mxu0 0.0
  %803 = vmatmul.mubr.f32.gmra.mrb[0].mxu0 %v24
  %v804 = vpop.f32.mrb[0].mxu0
  %v805 = vadd.f32 0.0, %v804
  %v806 = vpop.f32.mrb[0].mxu0
  %807 = vdwg.mxu0
  %808 = vmatprep.subr.mxu0 0.0
  %809 = vmatpush1.msra.mxu0 %v267
  %810 = vmatprep.subr.mxu0 0.0
  %811 = vmatpush1.msra.mxu0 %v268
  %812 = vmatprep.subr.mxu0 0.0
  %813 = vmatpush1.msra.mxu0 %v269
  %814 = vmatprep.subr.mxu0 0.0
  %815 = vmatpush1.msra.mxu0 %v270
  %816 = vmatprep.subr.mxu0 0.0
  %817 = vmatpush1.msra.mxu0 %v271
  %818 = vmatprep.subr.mxu0 0.0
  %819 = vmatpush1.msra.mxu0 %v272
  %820 = vmatprep.subr.mxu0 0.0
  %821 = vmatpush1.msra.mxu0 %v273
  %822 = vmatprep.subr.mxu0 0.0
  %823 = vmatpush1.msra.mxu0 %v274
  %824 = vmatprep.subr.mxu0 0.0
  %825 = vmatpush1.msra.mxu0 %v275
  %826 = vmatprep.subr.mxu0 0.0
  %827 = vmatpush1.msra.mxu0 %v276
  %828 = vmatprep.subr.mxu0 0.0
  %829 = vmatpush1.msra.mxu0 %v277
  %830 = vmatprep.subr.mxu0 0.0
  %831 = vmatpush1.msra.mxu0 %v278
  %832 = vmatprep.subr.mxu0 0.0
  %833 = vmatpush1.msra.mxu0 %v279
  %834 = vmatprep.subr.mxu0 0.0
  %835 = vmatpush1.msra.mxu0 %v280
  %836 = vmatprep.subr.mxu0 0.0
  %837 = vmatpush1.msra.mxu0 %v281
  %838 = vmatprep.subr.mxu0 0.0
  %839 = vmatpush1.msra.mxu0 %v282
  %840 = vmatprep.subr.mxu0 0.0
  %841 = vmatpush1.msra.mxu0 0.0
  %842 = vmatprep.subr.mxu0 0.0
  %843 = vmatpush1.msra.mxu0 0.0
  %844 = vmatprep.subr.mxu0 0.0
  %845 = vmatpush1.msra.mxu0 0.0
  %846 = vmatprep.subr.mxu0 0.0
  %847 = vmatpush1.msra.mxu0 0.0
  %848 = vmatprep.subr.mxu0 0.0
  %849 = vmatpush1.msra.mxu0 0.0
  %850 = vmatprep.subr.mxu0 0.0
  %851 = vmatpush1.msra.mxu0 0.0
  %852 = vmatprep.subr.mxu0 0.0
  %853 = vmatpush1.msra.mxu0 0.0
  %854 = vmatprep.subr.mxu0 0.0
  %855 = vmatpush1.msra.mxu0 0.0
  %856 = vmatprep.subr.mxu0 0.0
  %857 = vmatpush1.msra.mxu0 0.0
  %858 = vmatprep.subr.mxu0 0.0
  %859 = vmatpush1.msra.mxu0 0.0
  %860 = vmatprep.subr.mxu0 0.0
  %861 = vmatpush1.msra.mxu0 0.0
  %862 = vmatprep.subr.mxu0 0.0
  %863 = vmatpush1.msra.mxu0 0.0
  %864 = vmatprep.subr.mxu0 0.0
  %865 = vmatpush1.msra.mxu0 0.0
  %866 = vmatprep.subr.mxu0 0.0
  %867 = vmatpush1.msra.mxu0 0.0
  %868 = vmatprep.subr.mxu0 0.0
  %869 = vmatpush1.msra.mxu0 0.0
  %870 = vmatprep.subr.mxu0 0.0
  %871 = vmatpush1.msra.mxu0 0.0
  %872 = vmatprep.mubr.f32.mxu0 0.0
  %873 = vmatmul.mubr.f32.gmra.mrb[0].mxu0 %v25
  %v874 = vpop.f32.mrb[0].mxu0
  %v875 = vadd.f32 0.0, %v874
  %v876 = vpop.f32.mrb[0].mxu0
  %877 = vmatprep.mubr.f32.mxu0 0.0
  %878 = vmatmul.mubr.f32.gmra.mrb[0].mxu0 %v26
  %v879 = vpop.f32.mrb[0].mxu0
  %v880 = vadd.f32 0.0, %v879
  %v881 = vpop.f32.mrb[0].mxu0
  %882 = vdwg.mxu0
  %v883 = vpack.c.bf16 %v355, %v350
  %v884 = vpack.c.bf16 %v430, %v425
  %v885 = vpack.c.bf16 %v505, %v500
  %v886 = vpack.c.bf16 %v580, %v575
  %v887 = vpack.c.bf16 %v655, %v650
  %v888 = vpack.c.bf16 %v730, %v725
  %v889 = vpack.c.bf16 %v805, %v800
  %v890 = vpack.c.bf16 %v880, %v875
  %v899 = vunpack.c.l.b16 %v883
  %v900 = vunpack.c.h.b16 %v883
  %v901 = vunpack.c.l.b16 %v884
  %v902 = vunpack.c.h.b16 %v884
  %v903 = vunpack.c.l.b16 %v885
  %v904 = vunpack.c.h.b16 %v885
  %v905 = vunpack.c.l.b16 %v886
  %v906 = vunpack.c.h.b16 %v886
  %v907 = vunpack.c.l.b16 %v887
  %v908 = vunpack.c.h.b16 %v887
  %v909 = vunpack.c.l.b16 %v888
  %v910 = vunpack.c.h.b16 %v888
  %v911 = vunpack.c.l.b16 %v889
  %v912 = vunpack.c.h.b16 %v889
  %v913 = vunpack.c.l.b16 %v890
  %v914 = vunpack.c.h.b16 %v890
  %v915 = vpack.c.b16 %v899, %v899
  %v916 = vpack.c.b16 %v900, %v900
  %v917 = vpack.c.b16 %v901, %v901
  %v918 = vpack.c.b16 %v902, %v902
  %v919 = vpack.c.b16 %v903, %v903
  %v920 = vpack.c.b16 %v904, %v904
  %v921 = vpack.c.b16 %v905, %v905
  %v922 = vpack.c.b16 %v906, %v906
  %v923 = vpack.c.b16 %v907, %v907
  %v924 = vpack.c.b16 %v908, %v908
  %v925 = vpack.c.b16 %v909, %v909
  %v926 = vpack.c.b16 %v910, %v910
  %v927 = vpack.c.b16 %v911, %v911
  %v928 = vpack.c.b16 %v912, %v912
  %v929 = vpack.c.b16 %v913, %v913
  %v930 = vpack.c.b16 %v914, %v914
  %947 = vst [vmem:[%s2] sm:$0xf] %v915
  %948 = vst [vmem:[%s2 + $0x4] sm:$0xf] %v916
  %949 = vst [vmem:[%s2 + $0x8] sm:$0xf] %v917
  %950 = vst [vmem:[%s2 + $0xc] sm:$0xf] %v918
  %951 = vst [vmem:[%s2 + $0x10] sm:$0xf] %v919
  %952 = vst [vmem:[%s2 + $0x14] sm:$0xf] %v920
  %953 = vst [vmem:[%s2 + $0x18] sm:$0xf] %v921
  %954 = vst [vmem:[%s2 + $0x1c] sm:$0xf] %v922
  %955 = vst [vmem:[%s2 + $0x20] sm:$0xf] %v923
  %956 = vst [vmem:[%s2 + $0x24] sm:$0xf] %v924
  %957 = vst [vmem:[%s2 + $0x28] sm:$0xf] %v925
  %958 = vst [vmem:[%s2 + $0x2c] sm:$0xf] %v926
  %959 = vst [vmem:[%s2 + $0x30] sm:$0xf] %v927
  %960 = vst [vmem:[%s2 + $0x34] sm:$0xf] %v928
  %961 = vst [vmem:[%s2 + $0x38] sm:$0xf] %v929
  %962 = vst [vmem:[%s2 + $0x3c] sm:$0xf] %v930
  // Predicated region
  $region10: #{spectral_conv1d_packed.1} parent=0 // pred_check
    _
  $region11: #{spectral_conv1d_packed.1} parent=0 // pred_check_branch
    %964 = sbr.rel (0) target = $region13
  $region12: #{spectral_conv1d_packed.1} parent=0 // pred_region
    _
  $region13: #{spectral_conv1d_packed.1} parent=0 // pred_fallthru
    _
  // Predicated region
  $region14: #{spectral_conv1d_packed.1} parent=0 // pred_check
    _
  $region15: #{spectral_conv1d_packed.1} parent=0 // pred_check_branch
    %966 = sbr.rel (0) target = $region17
  $region16: #{spectral_conv1d_packed.1} parent=0 // pred_region
    _
  $region17: #{spectral_conv1d_packed.1} parent=0 // pred_fallthru
    _

</llo_original>
